<compile_context>
chip_gen: v7x
topology: tpu7x:2x2x1
jax: 0.10.0
libtpu: 0.0.40
codegen_flags: <defaults>
</compile_context>

<pallas_src>
import functools
import math

import jax
import jax.numpy as jnp
from jax.experimental import pallas as pl
from jax.experimental.pallas import tpu as pltpu


def _round_up(x, m):
    return (x + m - 1) // m * m


def _matmul_bias_kernel(a_ref, b_ref, bias_ref, o_ref, acc_ref):
    # a_ref   : (tm, tk)  im2col patch tile
    # b_ref   : (tk, tn)  weight tile
    # bias_ref: (1, tn)   bias tile (constant over i, k)
    # o_ref   : (tm, tn)  output tile
    # acc_ref : (tm, tn)  f32 accumulator scratch
    @pl.when(pl.program_id(2) == 0)
    def _():
        acc_ref[...] = jnp.zeros_like(acc_ref)

    acc_ref[...] += jnp.dot(
        a_ref[...], b_ref[...], preferred_element_type=jnp.float32
    )

    @pl.when(pl.program_id(2) == pl.num_programs(2) - 1)
    def _():
        # bias add hoisted out of the accumulation path (epilogue only)
        o_ref[...] = (acc_ref[...] + bias_ref[...]).astype(o_ref.dtype)


def conv2d_list_forward(
    x_nchw, weight_oihw, bias, *, stride=1, padding=0, tm=256, tn=128, tk=128
):
    """Pallas equivalent of Conv2dList.forward (F.conv2d with zero padding)."""
    N, C_in, H, W = x_nchw.shape
    C_out, _, K, _ = weight_oihw.shape

    # ---- plain-JAX glue: layout, zero padding, im2col ------------------------
    x = jnp.transpose(x_nchw, (0, 2, 3, 1))  # NCHW -> NHWC
    x = jnp.pad(x, ((0, 0), (padding, padding), (padding, padding), (0, 0)))
    H_pad, W_pad = H + 2 * padding, W + 2 * padding
    OH = (H_pad - K) // stride + 1
    OW = (W_pad - K) // stride + 1

    # im2col: patches[..., (kh*K + kw)*C_in + c]; stride handled here, not in
    # the kernel, so the kernel only ever sees a contiguous GEMM operand.
    cols = []
    for kh in range(K):
        for kw in range(K):
            cols.append(
                jax.lax.slice(
                    x,
                    (0, kh, kw, 0),
                    (N, kh + (OH - 1) * stride + 1,
                     kw + (OW - 1) * stride + 1, C_in),
                    (1, stride, stride, 1),
                )
            )
    patches = jnp.concatenate(cols, axis=-1).reshape(N * OH * OW, K * K * C_in)

    # weight OIHW -> (K, K, C_in, C_out) -> (K*K*C_in, C_out), matching patch order
    w = jnp.transpose(weight_oihw, (2, 3, 1, 0)).reshape(K * K * C_in, C_out)

    M, Kd = patches.shape
    M_pad = _round_up(M, tm)
    K_pad = _round_up(Kd, tk)
    N_pad = _round_up(C_out, tn)  # lane-dense output (>=128) even for tiny C_out

    a = jnp.pad(patches, ((0, M_pad - M), (0, K_pad - Kd)))
    b = jnp.pad(w, ((0, K_pad - Kd), (0, N_pad - C_out)))
    bias_p = jnp.pad(bias.astype(jnp.float32), (0, N_pad - C_out)).reshape(1, N_pad)

    grid = (M_pad // tm, N_pad // tn, K_pad // tk)

    flops = 2 * M * Kd * C_out
    bytes_accessed = (a.size + b.size + M_pad * N_pad) * a.dtype.itemsize

    out = pl.pallas_call(
        _matmul_bias_kernel,
        out_shape=jax.ShapeDtypeStruct((M_pad, N_pad), x.dtype),
        grid_spec=pltpu.PrefetchScalarGridSpec(
            num_scalar_prefetch=0,
            grid=grid,
            in_specs=[
                pl.BlockSpec((tm, tk), lambda i, j, k: (i, k)),
                pl.BlockSpec((tk, tn), lambda i, j, k: (k, j)),
                pl.BlockSpec((1, tn), lambda i, j, k: (0, j)),
            ],
            out_specs=pl.BlockSpec((tm, tn), lambda i, j, k: (i, j)),
            scratch_shapes=[pltpu.VMEM((tm, tn), jnp.float32)],
        ),
        compiler_params=pltpu.CompilerParams(
            dimension_semantics=("parallel", "parallel", "arbitrary"),
            vmem_limit_bytes=64 * 1024 * 1024,
        ),
        cost_estimate=pl.CostEstimate(
            flops=int(flops), transcendentals=0, bytes_accessed=int(bytes_accessed)
        ),
    )(a, b, bias_p)

    # strip padding, back to NCHW to match PyTorch
    out = out[:M, :C_out].reshape(N, OH, OW, C_out)
    return jnp.transpose(out, (0, 3, 1, 2))


def init_conv2d_list_params(key, in_channels, out_channels, kernel_size):
    """Replicates Conv2dList.__init__ initialization.

    kaiming_uniform_(a=sqrt(5)) on an OIHW weight -> U(-1/sqrt(fan_in), 1/sqrt(fan_in));
    bias -> U(-1/sqrt(fan_in), 1/sqrt(fan_in)). The ParameterList chunking is
    value-preserving (forward concatenates it back), so a single dense weight is used.
    """
    fan_in = in_channels * kernel_size * kernel_size
    bound = 1.0 / math.sqrt(fan_in)
    kw_, kb_ = jax.random.split(key)
    weight = jax.random.uniform(
        kw_,
        (out_channels, in_channels, kernel_size, kernel_size),
        minval=-bound,
        maxval=bound,
        dtype=jnp.float32,
    )
    bias = jax.random.uniform(
        kb_, (out_channels,), minval=-bound, maxval=bound, dtype=jnp.float32
    )
    return weight, bias


def _reference_conv(x, weight, bias, stride, padding):
    return jax.lax.conv_general_dilated(
        x,
        weight,
        (stride, stride),
        [(padding, padding), (padding, padding)],
        dimension_numbers=("NCHW", "OIHW", "NCHW"),
    ) + bias[None, :, None, None]


if __name__ == "__main__":
    key = jax.random.PRNGKey(0)
    k_x, k_p = jax.random.split(key)

    # Small shapes consistent with the module's forward (NCHW conv input).
    N, C_in, H, W = 2, 4, 16, 16
    C_out, K = 8, 3

    x = jax.random.normal(k_x, (N, C_in, H, W), dtype=jnp.float32)
    weight, bias = init_conv2d_list_params(k_p, C_in, C_out, K)

    # Case 1: stride=1, padding=1 (same-size conv)
    out = conv2d_list_forward(x, weight, bias, stride=1, padding=1)
    out = jax.block_until_ready(out)
    ref = _reference_conv(x, weight, bias, 1, 1)
    assert out.shape == ref.shape
    assert jnp.allclose(out, ref, atol=1e-4, rtol=1e-4)

    # Case 2: stride=2, padding=0 (stride handled in the wrapper, not in-kernel)
    out2 = conv2d_list_forward(x, weight, bias, stride=2, padding=0)
    out2 = jax.block_until_ready(out2)
    ref2 = _reference_conv(x, weight, bias, 2, 0)
    assert out2.shape == ref2.shape
    assert jnp.allclose(out2, ref2, atol=1e-4, rtol=1e-4)

    print("KERNEL_OK")
</pallas_src>

<mosaic_0001>
module attributes {stable_mosaic.version = 11 : i64} {
  func.func @_matmul_bias_kernel(%arg0: i32, %arg1: i32, %arg2: i32, %arg3: memref<256x128xf32, #tpu.memory_space<vmem>>, %arg4: memref<128x128xf32, #tpu.memory_space<vmem>>, %arg5: memref<1x128xf32, #tpu.memory_space<vmem>>, %arg6: memref<256x128xf32, #tpu.memory_space<vmem>>, %arg7: memref<256x128xf32, #tpu.memory_space<vmem>>) attributes {dimension_semantics = [#tpu.dimension_semantics<parallel>, #tpu.dimension_semantics<parallel>, #tpu.dimension_semantics<arbitrary>], iteration_bounds = array<i64: 2, 1, 1>, scalar_prefetch = 0 : i64, scratch_operands = 1 : i64, tpu.core_type = #tpu.core_type<tc>, window_params = [{transform_indices = @transform_0, window_bounds = array<i64: 256, 128>}, {transform_indices = @transform_1, window_bounds = array<i64: 128, 128>}, {transform_indices = @transform_2, window_bounds = array<i64: 1, 128>}, {transform_indices = @transform_3, window_bounds = array<i64: 256, 128>}]} {
    %c0_i32 = arith.constant 0 : i32
    %0 = arith.cmpi eq, %arg2, %c0_i32 : i32
    %1 = arith.extui %0 : i1 to i32
    %c0_i32_0 = arith.constant 0 : i32
    %2 = arith.cmpi ne, %1, %c0_i32_0 : i32
    scf.if %2 {
      %cst_10 = arith.constant 0.000000e+00 : f32
      %12 = vector.broadcast %cst_10 : f32 to vector<256x128xf32>
      %c0_11 = arith.constant 0 : index
      %c0_12 = arith.constant 0 : index
      %13 = vector.load %arg7[%c0_11, %c0_12] : memref<256x128xf32, #tpu.memory_space<vmem>>, vector<256x128xf32>
      tpu.vector_store %arg7[%c0_11, %c0_12], %12 {strides = array<i32>} : memref<256x128xf32, #tpu.memory_space<vmem>>, vector<256x128xf32>,
    } else {
    }
    %c0 = arith.constant 0 : index
    %c0_1 = arith.constant 0 : index
    %3 = vector.load %arg7[%c0, %c0_1] : memref<256x128xf32, #tpu.memory_space<vmem>>, vector<256x128xf32>
    %c0_2 = arith.constant 0 : index
    %c0_3 = arith.constant 0 : index
    %4 = vector.load %arg3[%c0_2, %c0_3] : memref<256x128xf32, #tpu.memory_space<vmem>>, vector<256x128xf32>
    %c0_4 = arith.constant 0 : index
    %c0_5 = arith.constant 0 : index
    %5 = vector.load %arg4[%c0_4, %c0_5] : memref<128x128xf32, #tpu.memory_space<vmem>>, vector<128x128xf32>
    %cst = arith.constant dense<0.000000e+00> : vector<256x128xf32>
    %6 = tpu.matmul %4, %5, %cst {dimension_numbers = #tpu.dot_dimension_numbers<[1], [0], [0], [1], [0, 0, 1, 1], [], []>} : vector<256x128xf32>, vector<128x128xf32>, vector<256x128xf32> -> vector<256x128xf32>
    %7 = arith.addf %3, %6 : vector<256x128xf32>
    %c0_6 = arith.constant 0 : index
    %c0_7 = arith.constant 0 : index
    %8 = vector.load %arg7[%c0_6, %c0_7] : memref<256x128xf32, #tpu.memory_space<vmem>>, vector<256x128xf32>
    tpu.vector_store %arg7[%c0_6, %c0_7], %7 {strides = array<i32>} : memref<256x128xf32, #tpu.memory_space<vmem>>, vector<256x128xf32>,
    %c0_i32_8 = arith.constant 0 : i32
    %9 = arith.cmpi eq, %arg2, %c0_i32_8 : i32
    %10 = arith.extui %9 : i1 to i32
    %c0_i32_9 = arith.constant 0 : i32
    %11 = arith.cmpi ne, %10, %c0_i32_9 : i32
    scf.if %11 {
      %c0_10 = arith.constant 0 : index
      %c0_11 = arith.constant 0 : index
      %12 = vector.load %arg7[%c0_10, %c0_11] : memref<256x128xf32, #tpu.memory_space<vmem>>, vector<256x128xf32>
      %c0_12 = arith.constant 0 : index
      %c0_13 = arith.constant 0 : index
      %13 = vector.load %arg5[%c0_12, %c0_13] : memref<1x128xf32, #tpu.memory_space<vmem>>, vector<1x128xf32>
      %14 = vector.broadcast %13 : vector<1x128xf32> to vector<256x128xf32>
      %15 = arith.addf %12, %14 : vector<256x128xf32>
      %c0_14 = arith.constant 0 : index
      %c0_15 = arith.constant 0 : index
      %16 = vector.load %arg6[%c0_14, %c0_15] : memref<256x128xf32, #tpu.memory_space<vmem>>, vector<256x128xf32>
      tpu.vector_store %arg6[%c0_14, %c0_15], %15 {strides = array<i32>} : memref<256x128xf32, #tpu.memory_space<vmem>>, vector<256x128xf32>,
    } else {
    }
    return
  }
  func.func @transform_0(%arg0: i32, %arg1: i32, %arg2: i32) -> (i32, i32) {
    %c0_i32 = arith.constant 0 : i32
    return %arg0, %arg2 : i32, i32
  }
  func.func @transform_1(%arg0: i32, %arg1: i32, %arg2: i32) -> (i32, i32) {
    %c0_i32 = arith.constant 0 : i32
    return %arg2, %arg1 : i32, i32
  }
  func.func @transform_2(%arg0: i32, %arg1: i32, %arg2: i32) -> (i32, i32) {
    %c0_i32 = arith.constant 0 : i32
    %c0_i32_0 = arith.constant 0 : i32
    return %c0_i32, %arg1 : i32, i32
  }
  func.func @transform_3(%arg0: i32, %arg1: i32, %arg2: i32) -> (i32, i32) {
    %c0_i32 = arith.constant 0 : i32
    return %arg0, %arg1 : i32, i32
  }
}

</mosaic_0001>

<llo_original>
// kernel: tpu_custom_call.1
$region0: #{tpu_custom_call.1}
  #allocation0 [shape = 'u32[]', space=smem, size = 0x4, offset = 0x4, fixed_abs, tag = 'smem constant byte address 0x4 - core index']
  #allocation1 [shape = 'u32[144,128]{1,0:T(1,128)}', space=vmem, size = 0x12000, scoped, tag = 'internal scratch']
  #allocation2 [shape = 'f32[256,128]{1,0:T(8,128)}', space=vmem, size = 0x20000, scoped, tag = 'scratch operand']
  %s0 = inlined_call_operand.hbm [shape: f32[512,128], index: 0, kind: input, shape index: {}]
  %s1 = inlined_call_operand.hbm [shape: f32[128,128], index: 1, kind: input, shape index: {}]
  %s2 = inlined_call_operand.hbm [shape: f32[1,128], index: 2, kind: input, shape index: {}]
  %s3 = inlined_call_operand.hbm [shape: f32[512,128], index: 3, kind: output, shape index: {}]
  %s4 = sld [smem:[#allocation0]]
  $region65: #{tpu_custom_call.1} parent=0
    _
  %s6 = ssub.s32 1, %s4
  %s7 = scalar_select 0, %s6, %s4
  $region1: #{tpu_custom_call.1} parent=0
    #allocation3 [shape = 'u8[262144]{0}', space=vmem, size = 0x40000, scoped, tag = 'input window, operand 0']
    #allocation4 [shape = 's32[2]{0}', space=sflag, size = 0x8, scoped, tag = 'scoped memory for tpu_custom_call.1']
    #allocation5 [shape = 's32[2]{0}', space=sflag, size = 0x8, scoped, tag = 'scoped memory for tpu_custom_call.1']
    #allocation6 [shape = 'u8[65536]{0}', space=vmem, size = 0x10000, scoped, tag = 'input window, operand 1, single buffered']
    #allocation7 [shape = 's32[1]{0}', space=sflag, size = 0x4, scoped, tag = 'scoped memory for tpu_custom_call.1']
    #allocation8 [shape = 'u8[512]{0}', space=vmem, size = 0x400, scoped, tag = 'input window, operand 2, single buffered']
    #allocation9 [shape = 'u8[262144]{0}', space=vmem, size = 0x40000, scoped, tag = 'output window, operand 0']
    %8 = vsyncpa [#allocation4], 0
    %s9 = scalar_lea.sflag [#allocation4], 1
    %10 = vsyncpa %s9, 0
    %11 = vsyncpa [#allocation7], 0
    %12 = vsyncpa [#allocation5], 0
    %s13 = scalar_lea.sflag [#allocation5], 1
    %14 = vsyncpa %s13, 0
    loop: start=0, step=1, limit=4
    $region2: #{tpu_custom_call.1} parent=1 // loop_pre_header
      _
    $region3: #{tpu_custom_call.1} parent=1 // loop_header
      %s16 = sphi 0, %s20
      %p17 = scmp.ge.s32.totalorder %s16, 4
      %s23 = sphi 0, %s42
      %s24 = sphi 0, %s38
      %s25 = sphi 0, %s34
      %s26 = sphi 0, %s23
      %s27 = sphi 0, %s24
      %s28 = sphi 0, %s25
      %s29 = sphi 0, %s26
      %s30 = sphi 0, %s27
      %s31 = sphi 0, %s28
      %s47 = sphi 0, %s49
      %s50 = sphi 0, %s47
      %s51 = sphi 0, %s50
      %s67 = sphi 0, %s51
      %s75 = sphi 0, %s77
      %s78 = sphi 0, %s75
      %s79 = sphi 0, %s78
      %s95 = sphi 0, %s79
      %s101 = sphi 0, %s103
      %s104 = sphi 0, %s101
      %s105 = sphi 0, %s104
      %s121 = sphi 0, %s105
      %s129 = sphi 0, %s131
      %s132 = sphi 0, %s129
      %s133 = sphi 0, %s132
      %s149 = sphi 0, %s133
    $region4: #{tpu_custom_call.1} parent=1 // loop_header_branch
      %19 = sbr.rel (%p17) target = $region8
    $region5: #{tpu_custom_call.1} parent=1 // loop_body
      %s21 = ssub.s32 %s16, 1
      %s22 = ssub.s32 %s16, 2
      %s32 = sadd.s32 1, %s25
      %p33 = scmp.ge.s32.totalorder %s32, 1
      %s34 = scalar_select %p33, 0, %s32
      %s35 = sadd.s32 1, %s24
      %s36 = scalar_select %p33, %s35, %s24
      %p37 = scmp.ge.s32.totalorder %s36, 1
      %s38 = scalar_select %p37, 0, %s36
      %s39 = sadd.s32 1, %s23
      %s40 = scalar_select %p37, %s39, %s23
      %p41 = scmp.ge.s32.totalorder %s40, 2
      %s42 = scalar_select %p41, 0, %s40
      %s43 = ssub.s32 %s23, %s42
      %s44 = ssub.s32 %s25, %s34
      %s45 = sor.u32 %s43, %s44
      %p46 = scmp.eq.s32.totalorder %s45, 0
      %s48 = sadd.s32 %s47, 1
      %s49 = scalar_select %p46, %s47, %s48
      %p52 = pneg %p46
      %p53 = scmp.eq.s32.totalorder %s16, 1
      %p54 = por %p52, %p53
      %p55 = scmp.ne.s32.totalorder %s47, %s50
      %p56 = scmp.eq.s32.totalorder %s16, 0
      %p57 = por %p55, %p56
      %p58 = scmp.ne.s32.totalorder %s47, %s50
      %p59 = scmp.eq.s32.totalorder %s21, 1
      %p60 = por %p58, %p59
      %p61 = scmp.ne.s32.totalorder %s50, %s51
      %p62 = scmp.eq.s32.totalorder %s21, 0
      %p63 = por %p61, %p62
      %p64 = scmp.ne.s32.totalorder %s50, %s51
      %p65 = scmp.eq.s32.totalorder %s22, 1
      %p66 = por %p64, %p65
      %p68 = scmp.ne.s32.totalorder %s51, %s67
      %p69 = scmp.eq.s32.totalorder %s22, 0
      %p70 = por %p68, %p69
      %s71 = ssub.s32 %s25, %s34
      %s72 = ssub.s32 %s24, %s38
      %s73 = sor.u32 %s71, %s72
      %p74 = scmp.eq.s32.totalorder %s73, 0
      %s76 = sadd.s32 %s75, 1
      %s77 = scalar_select %p74, %s75, %s76
      %p80 = pneg %p74
      %p81 = scmp.eq.s32.totalorder %s16, 1
      %p82 = por %p80, %p81
      %p83 = scmp.ne.s32.totalorder %s75, %s78
      %p84 = scmp.eq.s32.totalorder %s16, 0
      %p85 = por %p83, %p84
      %p86 = scmp.ne.s32.totalorder %s75, %s78
      %p87 = scmp.eq.s32.totalorder %s21, 1
      %p88 = por %p86, %p87
      %p89 = scmp.ne.s32.totalorder %s78, %s79
      %p90 = scmp.eq.s32.totalorder %s21, 0
      %p91 = por %p89, %p90
      %p92 = scmp.ne.s32.totalorder %s78, %s79
      %p93 = scmp.eq.s32.totalorder %s22, 1
      %p94 = por %p92, %p93
      %p96 = scmp.ne.s32.totalorder %s79, %s95
      %p97 = scmp.eq.s32.totalorder %s22, 0
      %p98 = por %p96, %p97
      %s99 = ssub.s32 %s24, %s38
      %p100 = scmp.eq.s32.totalorder %s99, 0
      %s102 = sadd.s32 %s101, 1
      %s103 = scalar_select %p100, %s101, %s102
      %p106 = pneg %p100
      %p107 = scmp.eq.s32.totalorder %s16, 1
      %p108 = por %p106, %p107
      %p109 = scmp.ne.s32.totalorder %s101, %s104
      %p110 = scmp.eq.s32.totalorder %s16, 0
      %p111 = por %p109, %p110
      %p112 = scmp.ne.s32.totalorder %s101, %s104
      %p113 = scmp.eq.s32.totalorder %s21, 1
      %p114 = por %p112, %p113
      %p115 = scmp.ne.s32.totalorder %s104, %s105
      %p116 = scmp.eq.s32.totalorder %s21, 0
      %p117 = por %p115, %p116
      %p118 = scmp.ne.s32.totalorder %s104, %s105
      %p119 = scmp.eq.s32.totalorder %s22, 1
      %p120 = por %p118, %p119
      %p122 = scmp.ne.s32.totalorder %s105, %s121
      %p123 = scmp.eq.s32.totalorder %s22, 0
      %p124 = por %p122, %p123
      %s125 = ssub.s32 %s23, %s42
      %s126 = ssub.s32 %s24, %s38
      %s127 = sor.u32 %s125, %s126
      %p128 = scmp.eq.s32.totalorder %s127, 0
      %s130 = sadd.s32 %s129, 1
      %s131 = scalar_select %p128, %s129, %s130
      %p134 = pneg %p128
      %p135 = scmp.eq.s32.totalorder %s16, 1
      %p136 = por %p134, %p135
      %p137 = scmp.ne.s32.totalorder %s129, %s132
      %p138 = scmp.eq.s32.totalorder %s16, 0
      %p139 = por %p137, %p138
      %p140 = scmp.ne.s32.totalorder %s129, %s132
      %p141 = scmp.eq.s32.totalorder %s21, 1
      %p142 = por %p140, %p141
      %p143 = scmp.ne.s32.totalorder %s132, %s133
      %p144 = scmp.eq.s32.totalorder %s21, 0
      %p145 = por %p143, %p144
      %p146 = scmp.ne.s32.totalorder %s132, %s133
      %p147 = scmp.eq.s32.totalorder %s22, 1
      %p148 = por %p146, %p147
      %p150 = scmp.ne.s32.totalorder %s133, %s149
      %p151 = scmp.eq.s32.totalorder %s22, 0
      %p152 = por %p150, %p151
      %p153 = scmp.le.s32.totalorder 1, %s16
      %p154 = scmp.lt.s32.totalorder %s16, 3
      %p155 = pnand %p153, %p154
      %p156 = pneg %p155
      // Predicated region
      $region9: #{tpu_custom_call.1} parent=5 // pred_check
        _
      $region10: #{tpu_custom_call.1} parent=5 // pred_check_branch
        %158 = sbr.rel (%p155) target = $region12
      $region11: #{tpu_custom_call.1} parent=5 // pred_region
        %s159 = ssub.s32 %s16, 1
        // Predicated region
        $region13: #{tpu_custom_call.1} parent=11 // pred_check
          %p160 = pneg %p91
        $region14: #{tpu_custom_call.1} parent=11 // pred_check_branch
          %162 = sbr.rel (%p160) target = $region16
        $region15: #{tpu_custom_call.1} parent=11 // pred_region
          %s163 = smul.u32 16, %s28
          %s165 = ssub.s32 2048, 2048
          %166 = vsyncadd [#allocation7], %s165
          %s167 = sadd.s32 %s27, %s163
          %s168 = smul.addr %s167, 128
          %s169 = scalar_lea.hbm %s1, %s168
          %s170 = sshll.u32 [#allocation6], 4
          %s171 = int_to_ptr.vmem [resolvable:$true] %s170
          %176 = dma.hbm_to_vmem [thread:$0]  %s169, 2048, %s171, [#allocation7], 128, 128, 8
        $region16: #{tpu_custom_call.1} parent=11 // pred_fallthru
          _
        // Predicated region
        $region17: #{tpu_custom_call.1} parent=11 // pred_check
          %p177 = pneg %p117
        $region18: #{tpu_custom_call.1} parent=11 // pred_check_branch
          %179 = sbr.rel (%p177) target = $region20
        $region19: #{tpu_custom_call.1} parent=11 // pred_region
          %s181 = ssub.s32 16, 16
          %182 = vsyncadd [#allocation7], %s181
          %s183 = smul.addr %s27, 16
          %s184 = scalar_lea.hbm %s2, %s183
          %s186 = sshll.u32 [#allocation8], 4
          %s187 = int_to_ptr.vmem [resolvable:$true] %s186
          %189 = dma.hbm_to_vmem [thread:$0]  %s184, 16, %s187, [#allocation7]
        $region20: #{tpu_custom_call.1} parent=11 // pred_fallthru
          _
      $region12: #{tpu_custom_call.1} parent=5 // pred_fallthru
        _
      %p190 = scmp.lt.s32.totalorder %s16, 2
      // Predicated region
      $region21: #{tpu_custom_call.1} parent=5 // pred_check
        %p191 = pneg %p190
      $region22: #{tpu_custom_call.1} parent=5 // pred_check_branch
        %193 = sbr.rel (%p191) target = $region24
      $region23: #{tpu_custom_call.1} parent=5 // pred_region
        // Predicated region
        $region25: #{tpu_custom_call.1} parent=23 // pred_check
          %p194 = pneg %p57
        $region26: #{tpu_custom_call.1} parent=23 // pred_check_branch
          %196 = sbr.rel (%p194) target = $region28
        $region27: #{tpu_custom_call.1} parent=23 // pred_region
          %s197 = sand.u32 %s47, 1
          %s198 = scalar_lea.sflag [#allocation4], %s197
          %s199 = sand.u32 %s47, 1
          %s200 = smul.addr %s199, 256
          %s201 = scalar_lea.vmem [#allocation3], %s200
          %s202 = smul.u32 32, %s23
          %s204 = ssub.s32 4096, 4096
          %205 = vsyncadd %s198, %s204
          %s206 = sadd.s32 %s25, %s202
          %s207 = smul.addr %s206, 128
          %s208 = scalar_lea.hbm %s0, %s207
          %s209 = sshll.u32 %s201, 4
          %s210 = int_to_ptr.vmem [resolvable:$true] %s209
          %215 = dma.hbm_to_vmem [thread:$0]  %s208, 4096, %s210, %s198, 128, 128, 8
        $region28: #{tpu_custom_call.1} parent=23 // pred_fallthru
          _
      $region24: #{tpu_custom_call.1} parent=5 // pred_fallthru
        _
      %p216 = scmp.le.s32.totalorder 1, %s16
      %p217 = scmp.lt.s32.totalorder %s16, 3
      %p218 = pnand %p216, %p217
      %p219 = pneg %p218
      // Predicated region
      $region29: #{tpu_custom_call.1} parent=5 // pred_check
        _
      $region30: #{tpu_custom_call.1} parent=5 // pred_check_branch
        %221 = sbr.rel (%p218) target = $region32
      $region31: #{tpu_custom_call.1} parent=5 // pred_region
        %s222 = ssub.s32 %s16, 1
        %s223 = sand.u32 %s50, 1
        %s224 = scalar_lea.sflag [#allocation4], %s223
        %s225 = sand.u32 %s50, 1
        %s226 = smul.addr %s225, 256
        %s227 = scalar_lea.vmem [#allocation3], %s226
        // Predicated region
        $region33: #{tpu_custom_call.1} parent=31 // pred_check
          %p228 = pneg %p63
        $region34: #{tpu_custom_call.1} parent=31 // pred_check_branch
          %230 = sbr.rel (%p228) target = $region36
        $region35: #{tpu_custom_call.1} parent=31 // pred_region
          %231 = dma.done %s224, 4096
        $region36: #{tpu_custom_call.1} parent=31 // pred_fallthru
          _
        // Predicated region
        $region37: #{tpu_custom_call.1} parent=31 // pred_check
          %p232 = pneg %p91
        $region38: #{tpu_custom_call.1} parent=31 // pred_check_branch
          %234 = sbr.rel (%p232) target = $region40
        $region39: #{tpu_custom_call.1} parent=31 // pred_region
          %235 = dma.done [#allocation7], 2048
        $region40: #{tpu_custom_call.1} parent=31 // pred_fallthru
          _
        // Predicated region
        $region41: #{tpu_custom_call.1} parent=31 // pred_check
          %p236 = pneg %p117
        $region42: #{tpu_custom_call.1} parent=31 // pred_check_branch
          %238 = sbr.rel (%p236) target = $region44
        $region43: #{tpu_custom_call.1} parent=31 // pred_region
          %239 = dma.done [#allocation7], 16
        $region44: #{tpu_custom_call.1} parent=31 // pred_fallthru
          _
        %s240 = sand.u32 %s50, 1
        %s241 = scalar_lea.sflag [#allocation4], %s240
        %s242 = sand.u32 %s50, 1
        %s243 = smul.addr %s242, 256
        %s244 = scalar_lea.vmem [#allocation3], %s243
        %p245 = pneg %p63
        %p246 = pneg %p60
        %p247 = pneg %p91
        %p248 = pneg %p88
        %p249 = pneg %p117
        %p250 = pneg %p114
        %p251 = pneg %p145
        %p252 = pneg %p142
        %s253 = sand.u32 %s132, 1
        %s254 = scalar_lea.sflag [#allocation5], %s253
        %s255 = sand.u32 %s132, 1
        %s256 = smul.addr %s255, 256
        %s257 = scalar_lea.vmem [#allocation9], %s256
        %s258 = smul.u32 32, %s26
        %s259 = smul.u32 16, %s28
        %s260 = smul.u32 32, %s26
        %p261 = scmp.eq.s32.totalorder %s28, 0
        // Predicated region
        $region45: #{tpu_custom_call.1} parent=31 // pred_check
          %p262 = pneg %p261
        $region46: #{tpu_custom_call.1} parent=31 // pred_check_branch
          %264 = sbr.rel (%p262) target = $region48
        $region47: #{tpu_custom_call.1} parent=31 // pred_region
          %265 = vst [vmem:[#allocation2] sm:$0xff] 0.0
          %266 = vst [vmem:[#allocation2 + $0x8] sm:$0xff] 0.0
          %267 = vst [vmem:[#allocation2 + $0x10] sm:$0xff] 0.0
          %268 = vst [vmem:[#allocation2 + $0x18] sm:$0xff] 0.0
          %269 = vst [vmem:[#allocation2 + $0x20] sm:$0xff] 0.0
          %270 = vst [vmem:[#allocation2 + $0x28] sm:$0xff] 0.0
          %271 = vst [vmem:[#allocation2 + $0x30] sm:$0xff] 0.0
          %272 = vst [vmem:[#allocation2 + $0x38] sm:$0xff] 0.0
          %273 = vst [vmem:[#allocation2 + $0x40] sm:$0xff] 0.0
          %274 = vst [vmem:[#allocation2 + $0x48] sm:$0xff] 0.0
          %275 = vst [vmem:[#allocation2 + $0x50] sm:$0xff] 0.0
          %276 = vst [vmem:[#allocation2 + $0x58] sm:$0xff] 0.0
          %277 = vst [vmem:[#allocation2 + $0x60] sm:$0xff] 0.0
          %278 = vst [vmem:[#allocation2 + $0x68] sm:$0xff] 0.0
          %279 = vst [vmem:[#allocation2 + $0x70] sm:$0xff] 0.0
          %280 = vst [vmem:[#allocation2 + $0x78] sm:$0xff] 0.0
          %281 = vst [vmem:[#allocation2 + $0x80] sm:$0xff] 0.0
          %282 = vst [vmem:[#allocation2 + $0x88] sm:$0xff] 0.0
          %283 = vst [vmem:[#allocation2 + $0x90] sm:$0xff] 0.0
          %284 = vst [vmem:[#allocation2 + $0x98] sm:$0xff] 0.0
          %285 = vst [vmem:[#allocation2 + $0xa0] sm:$0xff] 0.0
          %286 = vst [vmem:[#allocation2 + $0xa8] sm:$0xff] 0.0
          %287 = vst [vmem:[#allocation2 + $0xb0] sm:$0xff] 0.0
          %288 = vst [vmem:[#allocation2 + $0xb8] sm:$0xff] 0.0
          %289 = vst [vmem:[#allocation2 + $0xc0] sm:$0xff] 0.0
          %290 = vst [vmem:[#allocation2 + $0xc8] sm:$0xff] 0.0
          %291 = vst [vmem:[#allocation2 + $0xd0] sm:$0xff] 0.0
          %292 = vst [vmem:[#allocation2 + $0xd8] sm:$0xff] 0.0
          %293 = vst [vmem:[#allocation2 + $0xe0] sm:$0xff] 0.0
          %294 = vst [vmem:[#allocation2 + $0xe8] sm:$0xff] 0.0
          %295 = vst [vmem:[#allocation2 + $0xf0] sm:$0xff] 0.0
          %296 = vst [vmem:[#allocation2 + $0xf8] sm:$0xff] 0.0
        $region48: #{tpu_custom_call.1} parent=31 // pred_fallthru
          _
        %v297 = vld [vmem:[#allocation2] sm:$0xff]
        %v298 = vld [vmem:[#allocation2 + $0x8] sm:$0xff]
        %v299 = vld [vmem:[#allocation2 + $0x10] sm:$0xff]
        %v300 = vld [vmem:[#allocation2 + $0x18] sm:$0xff]
        %v301 = vld [vmem:[#allocation2 + $0x20] sm:$0xff]
        %v302 = vld [vmem:[#allocation2 + $0x28] sm:$0xff]
        %v303 = vld [vmem:[#allocation2 + $0x30] sm:$0xff]
        %v304 = vld [vmem:[#allocation2 + $0x38] sm:$0xff]
        %v305 = vld [vmem:[#allocation2 + $0x40] sm:$0xff]
        %v306 = vld [vmem:[#allocation2 + $0x48] sm:$0xff]
        %v307 = vld [vmem:[#allocation2 + $0x50] sm:$0xff]
        %v308 = vld [vmem:[#allocation2 + $0x58] sm:$0xff]
        %v309 = vld [vmem:[#allocation2 + $0x60] sm:$0xff]
        %v310 = vld [vmem:[#allocation2 + $0x68] sm:$0xff]
        %v311 = vld [vmem:[#allocation2 + $0x70] sm:$0xff]
        %v312 = vld [vmem:[#allocation2 + $0x78] sm:$0xff]
        %v313 = vld [vmem:[#allocation2 + $0x80] sm:$0xff]
        %v314 = vld [vmem:[#allocation2 + $0x88] sm:$0xff]
        %v315 = vld [vmem:[#allocation2 + $0x90] sm:$0xff]
        %v316 = vld [vmem:[#allocation2 + $0x98] sm:$0xff]
        %v317 = vld [vmem:[#allocation2 + $0xa0] sm:$0xff]
        %v318 = vld [vmem:[#allocation2 + $0xa8] sm:$0xff]
        %v319 = vld [vmem:[#allocation2 + $0xb0] sm:$0xff]
        %v320 = vld [vmem:[#allocation2 + $0xb8] sm:$0xff]
        %v321 = vld [vmem:[#allocation2 + $0xc0] sm:$0xff]
        %v322 = vld [vmem:[#allocation2 + $0xc8] sm:$0xff]
        %v323 = vld [vmem:[#allocation2 + $0xd0] sm:$0xff]
        %v324 = vld [vmem:[#allocation2 + $0xd8] sm:$0xff]
        %v325 = vld [vmem:[#allocation2 + $0xe0] sm:$0xff]
        %v326 = vld [vmem:[#allocation2 + $0xe8] sm:$0xff]
        %v327 = vld [vmem:[#allocation2 + $0xf0] sm:$0xff]
        %v328 = vld [vmem:[#allocation2 + $0xf8] sm:$0xff]
        %v329 = vld [vmem:[%s227] sm:$0xff]
        %v330 = vld [vmem:[%s227 + $0x8] sm:$0xff]
        %v331 = vld [vmem:[%s227 + $0x10] sm:$0xff]
        %v332 = vld [vmem:[%s227 + $0x18] sm:$0xff]
        %v333 = vld [vmem:[%s227 + $0x20] sm:$0xff]
        %v334 = vld [vmem:[%s227 + $0x28] sm:$0xff]
        %v335 = vld [vmem:[%s227 + $0x30] sm:$0xff]
        %v336 = vld [vmem:[%s227 + $0x38] sm:$0xff]
        %v337 = vld [vmem:[%s227 + $0x40] sm:$0xff]
        %v338 = vld [vmem:[%s227 + $0x48] sm:$0xff]
        %v339 = vld [vmem:[%s227 + $0x50] sm:$0xff]
        %v340 = vld [vmem:[%s227 + $0x58] sm:$0xff]
        %v341 = vld [vmem:[%s227 + $0x60] sm:$0xff]
        %v342 = vld [vmem:[%s227 + $0x68] sm:$0xff]
        %v343 = vld [vmem:[%s227 + $0x70] sm:$0xff]
        %v344 = vld [vmem:[%s227 + $0x78] sm:$0xff]
        %v345 = vld [vmem:[%s227 + $0x80] sm:$0xff]
        %v346 = vld [vmem:[%s227 + $0x88] sm:$0xff]
        %v347 = vld [vmem:[%s227 + $0x90] sm:$0xff]
        %v348 = vld [vmem:[%s227 + $0x98] sm:$0xff]
        %v349 = vld [vmem:[%s227 + $0xa0] sm:$0xff]
        %v350 = vld [vmem:[%s227 + $0xa8] sm:$0xff]
        %v351 = vld [vmem:[%s227 + $0xb0] sm:$0xff]
        %v352 = vld [vmem:[%s227 + $0xb8] sm:$0xff]
        %v353 = vld [vmem:[%s227 + $0xc0] sm:$0xff]
        %v354 = vld [vmem:[%s227 + $0xc8] sm:$0xff]
        %v355 = vld [vmem:[%s227 + $0xd0] sm:$0xff]
        %v356 = vld [vmem:[%s227 + $0xd8] sm:$0xff]
        %v357 = vld [vmem:[%s227 + $0xe0] sm:$0xff]
        %v358 = vld [vmem:[%s227 + $0xe8] sm:$0xff]
        %v359 = vld [vmem:[%s227 + $0xf0] sm:$0xff]
        %v360 = vld [vmem:[%s227 + $0xf8] sm:$0xff]
        %v361 = vld [vmem:[#allocation6] sm:$0xff]
        %v362 = vld [vmem:[#allocation6 + $0x8] sm:$0xff]
        %v363 = vld [vmem:[#allocation6 + $0x10] sm:$0xff]
        %v364 = vld [vmem:[#allocation6 + $0x18] sm:$0xff]
        %v365 = vld [vmem:[#allocation6 + $0x20] sm:$0xff]
        %v366 = vld [vmem:[#allocation6 + $0x28] sm:$0xff]
        %v367 = vld [vmem:[#allocation6 + $0x30] sm:$0xff]
        %v368 = vld [vmem:[#allocation6 + $0x38] sm:$0xff]
        %v369 = vld [vmem:[#allocation6 + $0x40] sm:$0xff]
        %v370 = vld [vmem:[#allocation6 + $0x48] sm:$0xff]
        %v371 = vld [vmem:[#allocation6 + $0x50] sm:$0xff]
        %v372 = vld [vmem:[#allocation6 + $0x58] sm:$0xff]
        %v373 = vld [vmem:[#allocation6 + $0x60] sm:$0xff]
        %v374 = vld [vmem:[#allocation6 + $0x68] sm:$0xff]
        %v375 = vld [vmem:[#allocation6 + $0x70] sm:$0xff]
        %v376 = vld [vmem:[#allocation6 + $0x78] sm:$0xff]
        %377 = vmatprep.subr.mxu0 0.0
        %378 = vmatpush1.msra.mxu0 %v361
        %379 = vmatprep.subr.mxu0 0.0
        %380 = vmatpush1.msra.mxu0 %v362
        %381 = vmatprep.subr.mxu0 0.0
        %382 = vmatpush1.msra.mxu0 %v363
        %383 = vmatprep.subr.mxu0 0.0
        %384 = vmatpush1.msra.mxu0 %v364
        %385 = vmatprep.subr.mxu0 0.0
        %386 = vmatpush1.msra.mxu0 %v365
        %387 = vmatprep.subr.mxu0 0.0
        %388 = vmatpush1.msra.mxu0 %v366
        %389 = vmatprep.subr.mxu0 0.0
        %390 = vmatpush1.msra.mxu0 %v367
        %391 = vmatprep.subr.mxu0 0.0
        %392 = vmatpush1.msra.mxu0 %v368
        %393 = vmatprep.subr.mxu0 0.0
        %394 = vmatpush1.msra.mxu0 %v369
        %395 = vmatprep.subr.mxu0 0.0
        %396 = vmatpush1.msra.mxu0 %v370
        %397 = vmatprep.subr.mxu0 0.0
        %398 = vmatpush1.msra.mxu0 %v371
        %399 = vmatprep.subr.mxu0 0.0
        %400 = vmatpush1.msra.mxu0 %v372
        %401 = vmatprep.subr.mxu0 0.0
        %402 = vmatpush1.msra.mxu0 %v373
        %403 = vmatprep.subr.mxu0 0.0
        %404 = vmatpush1.msra.mxu0 %v374
        %405 = vmatprep.subr.mxu0 0.0
        %406 = vmatpush1.msra.mxu0 %v375
        %407 = vmatprep.subr.mxu0 0.0
        %408 = vmatpush1.msra.mxu0 %v376
        %409 = vmatprep.subr.mxu0 0.0
        %410 = vmatpush1.msra.mxu0 0.0
        %411 = vmatprep.subr.mxu0 0.0
        %412 = vmatpush1.msra.mxu0 0.0
        %413 = vmatprep.subr.mxu0 0.0
        %414 = vmatpush1.msra.mxu0 0.0
        %415 = vmatprep.subr.mxu0 0.0
        %416 = vmatpush1.msra.mxu0 0.0
        %417 = vmatprep.subr.mxu0 0.0
        %418 = vmatpush1.msra.mxu0 0.0
        %419 = vmatprep.subr.mxu0 0.0
        %420 = vmatpush1.msra.mxu0 0.0
        %421 = vmatprep.subr.mxu0 0.0
        %422 = vmatpush1.msra.mxu0 0.0
        %423 = vmatprep.subr.mxu0 0.0
        %424 = vmatpush1.msra.mxu0 0.0
        %425 = vmatprep.subr.mxu0 0.0
        %426 = vmatpush1.msra.mxu0 0.0
        %427 = vmatprep.subr.mxu0 0.0
        %428 = vmatpush1.msra.mxu0 0.0
        %429 = vmatprep.subr.mxu0 0.0
        %430 = vmatpush1.msra.mxu0 0.0
        %431 = vmatprep.subr.mxu0 0.0
        %432 = vmatpush1.msra.mxu0 0.0
        %433 = vmatprep.subr.mxu0 0.0
        %434 = vmatpush1.msra.mxu0 0.0
        %435 = vmatprep.subr.mxu0 0.0
        %436 = vmatpush1.msra.mxu0 0.0
        %437 = vmatprep.subr.mxu0 0.0
        %438 = vmatpush1.msra.mxu0 0.0
        %439 = vmatprep.subr.mxu0 0.0
        %440 = vmatpush1.msra.mxu0 0.0
        %441 = vmatprep.mubr.f32.mxu0 0.0
        %442 = vmatmul.mubr.f32.gmra.mrb[0].mxu0 %v329
        %v443 = vpop.f32.mrb[0].mxu0
        %v444 = vadd.f32 0.0, %v443
        %v445 = vpop.f32.mrb[0].mxu0
        %446 = vmatprep.mubr.f32.mxu0 0.0
        %447 = vmatmul.mubr.f32.gmra.mrb[0].mxu0 %v330
        %v448 = vpop.f32.mrb[0].mxu0
        %v449 = vadd.f32 0.0, %v448
        %v450 = vpop.f32.mrb[0].mxu0
        %451 = vmatprep.mubr.f32.mxu0 0.0
        %452 = vmatmul.mubr.f32.gmra.mrb[0].mxu0 %v331
        %v453 = vpop.f32.mrb[0].mxu0
        %v454 = vadd.f32 0.0, %v453
        %v455 = vpop.f32.mrb[0].mxu0
        %456 = vmatprep.mubr.f32.mxu0 0.0
        %457 = vmatmul.mubr.f32.gmra.mrb[0].mxu0 %v332
        %v458 = vpop.f32.mrb[0].mxu0
        %v459 = vadd.f32 0.0, %v458
        %v460 = vpop.f32.mrb[0].mxu0
        %461 = vmatprep.mubr.f32.mxu0 0.0
        %462 = vmatmul.mubr.f32.gmra.mrb[0].mxu0 %v333
        %v463 = vpop.f32.mrb[0].mxu0
        %v464 = vadd.f32 0.0, %v463
        %v465 = vpop.f32.mrb[0].mxu0
        %466 = vmatprep.mubr.f32.mxu0 0.0
        %467 = vmatmul.mubr.f32.gmra.mrb[0].mxu0 %v334
        %v468 = vpop.f32.mrb[0].mxu0
        %v469 = vadd.f32 0.0, %v468
        %v470 = vpop.f32.mrb[0].mxu0
        %471 = vmatprep.mubr.f32.mxu0 0.0
        %472 = vmatmul.mubr.f32.gmra.mrb[0].mxu0 %v335
        %v473 = vpop.f32.mrb[0].mxu0
        %v474 = vadd.f32 0.0, %v473
        %v475 = vpop.f32.mrb[0].mxu0
        %476 = vmatprep.mubr.f32.mxu0 0.0
        %477 = vmatmul.mubr.f32.gmra.mrb[0].mxu0 %v336
        %v478 = vpop.f32.mrb[0].mxu0
        %v479 = vadd.f32 0.0, %v478
        %v480 = vpop.f32.mrb[0].mxu0
        %481 = vmatprep.mubr.f32.mxu0 0.0
        %482 = vmatmul.mubr.f32.gmra.mrb[0].mxu0 %v337
        %v483 = vpop.f32.mrb[0].mxu0
        %v484 = vadd.f32 0.0, %v483
        %v485 = vpop.f32.mrb[0].mxu0
        %486 = vmatprep.mubr.f32.mxu0 0.0
        %487 = vmatmul.mubr.f32.gmra.mrb[0].mxu0 %v338
        %v488 = vpop.f32.mrb[0].mxu0
        %v489 = vadd.f32 0.0, %v488
        %v490 = vpop.f32.mrb[0].mxu0
        %491 = vmatprep.mubr.f32.mxu0 0.0
        %492 = vmatmul.mubr.f32.gmra.mrb[0].mxu0 %v339
        %v493 = vpop.f32.mrb[0].mxu0
        %v494 = vadd.f32 0.0, %v493
        %v495 = vpop.f32.mrb[0].mxu0
        %496 = vmatprep.mubr.f32.mxu0 0.0
        %497 = vmatmul.mubr.f32.gmra.mrb[0].mxu0 %v340
        %v498 = vpop.f32.mrb[0].mxu0
        %v499 = vadd.f32 0.0, %v498
        %v500 = vpop.f32.mrb[0].mxu0
        %501 = vmatprep.mubr.f32.mxu0 0.0
        %502 = vmatmul.mubr.f32.gmra.mrb[0].mxu0 %v341
        %v503 = vpop.f32.mrb[0].mxu0
        %v504 = vadd.f32 0.0, %v503
        %v505 = vpop.f32.mrb[0].mxu0
        %506 = vmatprep.mubr.f32.mxu0 0.0
        %507 = vmatmul.mubr.f32.gmra.mrb[0].mxu0 %v342
        %v508 = vpop.f32.mrb[0].mxu0
        %v509 = vadd.f32 0.0, %v508
        %v510 = vpop.f32.mrb[0].mxu0
        %511 = vmatprep.mubr.f32.mxu0 0.0
        %512 = vmatmul.mubr.f32.gmra.mrb[0].mxu0 %v343
        %v513 = vpop.f32.mrb[0].mxu0
        %v514 = vadd.f32 0.0, %v513
        %v515 = vpop.f32.mrb[0].mxu0
        %516 = vmatprep.mubr.f32.mxu0 0.0
        %517 = vmatmul.mubr.f32.gmra.mrb[0].mxu0 %v344
        %v518 = vpop.f32.mrb[0].mxu0
        %v519 = vadd.f32 0.0, %v518
        %v520 = vpop.f32.mrb[0].mxu0
        %521 = vmatprep.mubr.f32.mxu0 0.0
        %522 = vmatmul.mubr.f32.gmra.mrb[0].mxu0 %v345
        %v523 = vpop.f32.mrb[0].mxu0
        %v524 = vadd.f32 0.0, %v523
        %v525 = vpop.f32.mrb[0].mxu0
        %526 = vmatprep.mubr.f32.mxu0 0.0
        %527 = vmatmul.mubr.f32.gmra.mrb[0].mxu0 %v346
        %v528 = vpop.f32.mrb[0].mxu0
        %v529 = vadd.f32 0.0, %v528
        %v530 = vpop.f32.mrb[0].mxu0
        %531 = vmatprep.mubr.f32.mxu0 0.0
        %532 = vmatmul.mubr.f32.gmra.mrb[0].mxu0 %v347
        %v533 = vpop.f32.mrb[0].mxu0
        %v534 = vadd.f32 0.0, %v533
        %v535 = vpop.f32.mrb[0].mxu0
        %536 = vmatprep.mubr.f32.mxu0 0.0
        %537 = vmatmul.mubr.f32.gmra.mrb[0].mxu0 %v348
        %v538 = vpop.f32.mrb[0].mxu0
        %v539 = vadd.f32 0.0, %v538
        %v540 = vpop.f32.mrb[0].mxu0
        %541 = vmatprep.mubr.f32.mxu0 0.0
        %542 = vmatmul.mubr.f32.gmra.mrb[0].mxu0 %v349
        %v543 = vpop.f32.mrb[0].mxu0
        %v544 = vadd.f32 0.0, %v543
        %v545 = vpop.f32.mrb[0].mxu0
        %546 = vmatprep.mubr.f32.mxu0 0.0
        %547 = vmatmul.mubr.f32.gmra.mrb[0].mxu0 %v350
        %v548 = vpop.f32.mrb[0].mxu0
        %v549 = vadd.f32 0.0, %v548
        %v550 = vpop.f32.mrb[0].mxu0
        %551 = vmatprep.mubr.f32.mxu0 0.0
        %552 = vmatmul.mubr.f32.gmra.mrb[0].mxu0 %v351
        %v553 = vpop.f32.mrb[0].mxu0
        %v554 = vadd.f32 0.0, %v553
        %v555 = vpop.f32.mrb[0].mxu0
        %556 = vmatprep.mubr.f32.mxu0 0.0
        %557 = vmatmul.mubr.f32.gmra.mrb[0].mxu0 %v352
        %v558 = vpop.f32.mrb[0].mxu0
        %v559 = vadd.f32 0.0, %v558
        %v560 = vpop.f32.mrb[0].mxu0
        %561 = vmatprep.mubr.f32.mxu0 0.0
        %562 = vmatmul.mubr.f32.gmra.mrb[0].mxu0 %v353
        %v563 = vpop.f32.mrb[0].mxu0
        %v564 = vadd.f32 0.0, %v563
        %v565 = vpop.f32.mrb[0].mxu0
        %566 = vmatprep.mubr.f32.mxu0 0.0
        %567 = vmatmul.mubr.f32.gmra.mrb[0].mxu0 %v354
        %v568 = vpop.f32.mrb[0].mxu0
        %v569 = vadd.f32 0.0, %v568
        %v570 = vpop.f32.mrb[0].mxu0
        %571 = vmatprep.mubr.f32.mxu0 0.0
        %572 = vmatmul.mubr.f32.gmra.mrb[0].mxu0 %v355
        %v573 = vpop.f32.mrb[0].mxu0
        %v574 = vadd.f32 0.0, %v573
        %v575 = vpop.f32.mrb[0].mxu0
        %576 = vmatprep.mubr.f32.mxu0 0.0
        %577 = vmatmul.mubr.f32.gmra.mrb[0].mxu0 %v356
        %v578 = vpop.f32.mrb[0].mxu0
        %v579 = vadd.f32 0.0, %v578
        %v580 = vpop.f32.mrb[0].mxu0
        %581 = vmatprep.mubr.f32.mxu0 0.0
        %582 = vmatmul.mubr.f32.gmra.mrb[0].mxu0 %v357
        %v583 = vpop.f32.mrb[0].mxu0
        %v584 = vadd.f32 0.0, %v583
        %v585 = vpop.f32.mrb[0].mxu0
        %586 = vmatprep.mubr.f32.mxu0 0.0
        %587 = vmatmul.mubr.f32.gmra.mrb[0].mxu0 %v358
        %v588 = vpop.f32.mrb[0].mxu0
        %v589 = vadd.f32 0.0, %v588
        %v590 = vpop.f32.mrb[0].mxu0
        %591 = vmatprep.mubr.f32.mxu0 0.0
        %592 = vmatmul.mubr.f32.gmra.mrb[0].mxu0 %v359
        %v593 = vpop.f32.mrb[0].mxu0
        %v594 = vadd.f32 0.0, %v593
        %v595 = vpop.f32.mrb[0].mxu0
        %596 = vmatprep.mubr.f32.mxu0 0.0
        %597 = vmatmul.mubr.f32.gmra.mrb[0].mxu0 %v360
        %v598 = vpop.f32.mrb[0].mxu0
        %v599 = vadd.f32 0.0, %v598
        %v600 = vpop.f32.mrb[0].mxu0
        %601 = vdwg.mxu0
        %v602 = vadd.f32 %v297, %v444
        %v603 = vadd.f32 %v298, %v449
        %v604 = vadd.f32 %v299, %v454
        %v605 = vadd.f32 %v300, %v459
        %v606 = vadd.f32 %v301, %v464
        %v607 = vadd.f32 %v302, %v469
        %v608 = vadd.f32 %v303, %v474
        %v609 = vadd.f32 %v304, %v479
        %v610 = vadd.f32 %v305, %v484
        %v611 = vadd.f32 %v306, %v489
        %v612 = vadd.f32 %v307, %v494
        %v613 = vadd.f32 %v308, %v499
        %v614 = vadd.f32 %v309, %v504
        %v615 = vadd.f32 %v310, %v509
        %v616 = vadd.f32 %v311, %v514
        %v617 = vadd.f32 %v312, %v519
        %v618 = vadd.f32 %v313, %v524
        %v619 = vadd.f32 %v314, %v529
        %v620 = vadd.f32 %v315, %v534
        %v621 = vadd.f32 %v316, %v539
        %v622 = vadd.f32 %v317, %v544
        %v623 = vadd.f32 %v318, %v549
        %v624 = vadd.f32 %v319, %v554
        %v625 = vadd.f32 %v320, %v559
        %v626 = vadd.f32 %v321, %v564
        %v627 = vadd.f32 %v322, %v569
        %v628 = vadd.f32 %v323, %v574
        %v629 = vadd.f32 %v324, %v579
        %v630 = vadd.f32 %v325, %v584
        %v631 = vadd.f32 %v326, %v589
        %v632 = vadd.f32 %v327, %v594
        %v633 = vadd.f32 %v328, %v599
        %634 = vst [vmem:[#allocation2] sm:$0xff] %v602
        %635 = vst [vmem:[#allocation2 + $0x8] sm:$0xff] %v603
        %636 = vst [vmem:[#allocation2 + $0x10] sm:$0xff] %v604
        %637 = vst [vmem:[#allocation2 + $0x18] sm:$0xff] %v605
        %638 = vst [vmem:[#allocation2 + $0x20] sm:$0xff] %v606
        %639 = vst [vmem:[#allocation2 + $0x28] sm:$0xff] %v607
        %640 = vst [vmem:[#allocation2 + $0x30] sm:$0xff] %v608
        %641 = vst [vmem:[#allocation2 + $0x38] sm:$0xff] %v609
        %642 = vst [vmem:[#allocation2 + $0x40] sm:$0xff] %v610
        %643 = vst [vmem:[#allocation2 + $0x48] sm:$0xff] %v611
        %644 = vst [vmem:[#allocation2 + $0x50] sm:$0xff] %v612
        %645 = vst [vmem:[#allocation2 + $0x58] sm:$0xff] %v613
        %646 = vst [vmem:[#allocation2 + $0x60] sm:$0xff] %v614
        %647 = vst [vmem:[#allocation2 + $0x68] sm:$0xff] %v615
        %648 = vst [vmem:[#allocation2 + $0x70] sm:$0xff] %v616
        %649 = vst [vmem:[#allocation2 + $0x78] sm:$0xff] %v617
        %650 = vst [vmem:[#allocation2 + $0x80] sm:$0xff] %v618
        %651 = vst [vmem:[#allocation2 + $0x88] sm:$0xff] %v619
        %652 = vst [vmem:[#allocation2 + $0x90] sm:$0xff] %v620
        %653 = vst [vmem:[#allocation2 + $0x98] sm:$0xff] %v621
        %654 = vst [vmem:[#allocation2 + $0xa0] sm:$0xff] %v622
        %655 = vst [vmem:[#allocation2 + $0xa8] sm:$0xff] %v623
        %656 = vst [vmem:[#allocation2 + $0xb0] sm:$0xff] %v624
        %657 = vst [vmem:[#allocation2 + $0xb8] sm:$0xff] %v625
        %658 = vst [vmem:[#allocation2 + $0xc0] sm:$0xff] %v626
        %659 = vst [vmem:[#allocation2 + $0xc8] sm:$0xff] %v627
        %660 = vst [vmem:[#allocation2 + $0xd0] sm:$0xff] %v628
        %661 = vst [vmem:[#allocation2 + $0xd8] sm:$0xff] %v629
        %662 = vst [vmem:[#allocation2 + $0xe0] sm:$0xff] %v630
        %663 = vst [vmem:[#allocation2 + $0xe8] sm:$0xff] %v631
        %664 = vst [vmem:[#allocation2 + $0xf0] sm:$0xff] %v632
        %665 = vst [vmem:[#allocation2 + $0xf8] sm:$0xff] %v633
        // Predicated region
        $region49: #{tpu_custom_call.1} parent=31 // pred_check
          %p666 = pneg %p261
        $region50: #{tpu_custom_call.1} parent=31 // pred_check_branch
          %668 = sbr.rel (%p666) target = $region52
        $region51: #{tpu_custom_call.1} parent=31 // pred_region
          %v669 = vld [vmem:[#allocation2] sm:$0xff]
          %v670 = vld [vmem:[#allocation2 + $0x8] sm:$0xff]
          %v671 = vld [vmem:[#allocation2 + $0x10] sm:$0xff]
          %v672 = vld [vmem:[#allocation2 + $0x18] sm:$0xff]
          %v673 = vld [vmem:[#allocation2 + $0x20] sm:$0xff]
          %v674 = vld [vmem:[#allocation2 + $0x28] sm:$0xff]
          %v675 = vld [vmem:[#allocation2 + $0x30] sm:$0xff]
          %v676 = vld [vmem:[#allocation2 + $0x38] sm:$0xff]
          %v677 = vld [vmem:[#allocation2 + $0x40] sm:$0xff]
          %v678 = vld [vmem:[#allocation2 + $0x48] sm:$0xff]
          %v679 = vld [vmem:[#allocation2 + $0x50] sm:$0xff]
          %v680 = vld [vmem:[#allocation2 + $0x58] sm:$0xff]
          %v681 = vld [vmem:[#allocation2 + $0x60] sm:$0xff]
          %v682 = vld [vmem:[#allocation2 + $0x68] sm:$0xff]
          %v683 = vld [vmem:[#allocation2 + $0x70] sm:$0xff]
          %v684 = vld [vmem:[#allocation2 + $0x78] sm:$0xff]
          %v685 = vld [vmem:[#allocation2 + $0x80] sm:$0xff]
          %v686 = vld [vmem:[#allocation2 + $0x88] sm:$0xff]
          %v687 = vld [vmem:[#allocation2 + $0x90] sm:$0xff]
          %v688 = vld [vmem:[#allocation2 + $0x98] sm:$0xff]
          %v689 = vld [vmem:[#allocation2 + $0xa0] sm:$0xff]
          %v690 = vld [vmem:[#allocation2 + $0xa8] sm:$0xff]
          %v691 = vld [vmem:[#allocation2 + $0xb0] sm:$0xff]
          %v692 = vld [vmem:[#allocation2 + $0xb8] sm:$0xff]
          %v693 = vld [vmem:[#allocation2 + $0xc0] sm:$0xff]
          %v694 = vld [vmem:[#allocation2 + $0xc8] sm:$0xff]
          %v695 = vld [vmem:[#allocation2 + $0xd0] sm:$0xff]
          %v696 = vld [vmem:[#allocation2 + $0xd8] sm:$0xff]
          %v697 = vld [vmem:[#allocation2 + $0xe0] sm:$0xff]
          %v698 = vld [vmem:[#allocation2 + $0xe8] sm:$0xff]
          %v699 = vld [vmem:[#allocation2 + $0xf0] sm:$0xff]
          %v700 = vld [vmem:[#allocation2 + $0xf8] sm:$0xff]
          %v701 = vld [vmem:[#allocation8] sm:$0x1]
          %v703 = vlaneseq
          %v704 = vshrl.u32 %v703, 7
          %v705 = vsub.s32 0, %v704
          %v706 = vrot.slane %v701, %v705
          %v708 = vadd.f32 %v669, %v706
          %v709 = vadd.f32 %v670, %v706
          %v710 = vadd.f32 %v671, %v706
          %v711 = vadd.f32 %v672, %v706
          %v712 = vadd.f32 %v673, %v706
          %v713 = vadd.f32 %v674, %v706
          %v714 = vadd.f32 %v675, %v706
          %v715 = vadd.f32 %v676, %v706
          %v716 = vadd.f32 %v677, %v706
          %v717 = vadd.f32 %v678, %v706
          %v718 = vadd.f32 %v679, %v706
          %v719 = vadd.f32 %v680, %v706
          %v720 = vadd.f32 %v681, %v706
          %v721 = vadd.f32 %v682, %v706
          %v722 = vadd.f32 %v683, %v706
          %v723 = vadd.f32 %v684, %v706
          %v724 = vadd.f32 %v685, %v706
          %v725 = vadd.f32 %v686, %v706
          %v726 = vadd.f32 %v687, %v706
          %v727 = vadd.f32 %v688, %v706
          %v728 = vadd.f32 %v689, %v706
          %v729 = vadd.f32 %v690, %v706
          %v730 = vadd.f32 %v691, %v706
          %v731 = vadd.f32 %v692, %v706
          %v732 = vadd.f32 %v693, %v706
          %v733 = vadd.f32 %v694, %v706
          %v734 = vadd.f32 %v695, %v706
          %v735 = vadd.f32 %v696, %v706
          %v736 = vadd.f32 %v697, %v706
          %v737 = vadd.f32 %v698, %v706
          %v738 = vadd.f32 %v699, %v706
          %v739 = vadd.f32 %v700, %v706
          %740 = vst [vmem:[%s257] sm:$0xff] %v708
          %741 = vst [vmem:[%s257 + $0x8] sm:$0xff] %v709
          %742 = vst [vmem:[%s257 + $0x10] sm:$0xff] %v710
          %743 = vst [vmem:[%s257 + $0x18] sm:$0xff] %v711
          %744 = vst [vmem:[%s257 + $0x20] sm:$0xff] %v712
          %745 = vst [vmem:[%s257 + $0x28] sm:$0xff] %v713
          %746 = vst [vmem:[%s257 + $0x30] sm:$0xff] %v714
          %747 = vst [vmem:[%s257 + $0x38] sm:$0xff] %v715
          %748 = vst [vmem:[%s257 + $0x40] sm:$0xff] %v716
          %749 = vst [vmem:[%s257 + $0x48] sm:$0xff] %v717
          %750 = vst [vmem:[%s257 + $0x50] sm:$0xff] %v718
          %751 = vst [vmem:[%s257 + $0x58] sm:$0xff] %v719
          %752 = vst [vmem:[%s257 + $0x60] sm:$0xff] %v720
          %753 = vst [vmem:[%s257 + $0x68] sm:$0xff] %v721
          %754 = vst [vmem:[%s257 + $0x70] sm:$0xff] %v722
          %755 = vst [vmem:[%s257 + $0x78] sm:$0xff] %v723
          %756 = vst [vmem:[%s257 + $0x80] sm:$0xff] %v724
          %757 = vst [vmem:[%s257 + $0x88] sm:$0xff] %v725
          %758 = vst [vmem:[%s257 + $0x90] sm:$0xff] %v726
          %759 = vst [vmem:[%s257 + $0x98] sm:$0xff] %v727
          %760 = vst [vmem:[%s257 + $0xa0] sm:$0xff] %v728
          %761 = vst [vmem:[%s257 + $0xa8] sm:$0xff] %v729
          %762 = vst [vmem:[%s257 + $0xb0] sm:$0xff] %v730
          %763 = vst [vmem:[%s257 + $0xb8] sm:$0xff] %v731
          %764 = vst [vmem:[%s257 + $0xc0] sm:$0xff] %v732
          %765 = vst [vmem:[%s257 + $0xc8] sm:$0xff] %v733
          %766 = vst [vmem:[%s257 + $0xd0] sm:$0xff] %v734
          %767 = vst [vmem:[%s257 + $0xd8] sm:$0xff] %v735
          %768 = vst [vmem:[%s257 + $0xe0] sm:$0xff] %v736
          %769 = vst [vmem:[%s257 + $0xe8] sm:$0xff] %v737
          %770 = vst [vmem:[%s257 + $0xf0] sm:$0xff] %v738
          %771 = vst [vmem:[%s257 + $0xf8] sm:$0xff] %v739
        $region52: #{tpu_custom_call.1} parent=31 // pred_fallthru
          _
        %s772 = sand.u32 %s132, 1
        %s773 = scalar_lea.sflag [#allocation5], %s772
        %s774 = sand.u32 %s132, 1
        %s775 = smul.addr %s774, 256
        %s776 = scalar_lea.vmem [#allocation9], %s775
        // Predicated region
        $region53: #{tpu_custom_call.1} parent=31 // pred_check
          %p777 = pneg %p142
        $region54: #{tpu_custom_call.1} parent=31 // pred_check_branch
          %779 = sbr.rel (%p777) target = $region56
        $region55: #{tpu_custom_call.1} parent=31 // pred_region
          %s780 = smul.u32 32, %s26
          %s782 = ssub.s32 4096, 4096
          %783 = vsyncadd %s773, %s782
          %s784 = sadd.s32 %s27, %s780
          %s785 = smul.addr %s784, 128
          %s786 = scalar_lea.hbm %s3, %s785
          %s787 = sshll.u32 %s776, 4
          %s788 = int_to_ptr.vmem [resolvable:$true] %s787
          %793 = dma.vmem_to_hbm [thread:$0]  %s788, 4096, %s786, %s773, 128, 128, 8
        $region56: #{tpu_custom_call.1} parent=31 // pred_fallthru
          _
      $region32: #{tpu_custom_call.1} parent=5 // pred_fallthru
        _
      %p794 = scmp.le.s32.totalorder 2, %s16
      // Predicated region
      $region57: #{tpu_custom_call.1} parent=5 // pred_check
        %p795 = pneg %p794
      $region58: #{tpu_custom_call.1} parent=5 // pred_check_branch
        %797 = sbr.rel (%p795) target = $region60
      $region59: #{tpu_custom_call.1} parent=5 // pred_region
        %s798 = ssub.s32 %s16, 2
        // Predicated region
        $region61: #{tpu_custom_call.1} parent=59 // pred_check
          %p799 = pneg %p148
        $region62: #{tpu_custom_call.1} parent=59 // pred_check_branch
          %801 = sbr.rel (%p799) target = $region64
        $region63: #{tpu_custom_call.1} parent=59 // pred_region
          %s802 = sand.u32 %s133, 1
          %s803 = scalar_lea.sflag [#allocation5], %s802
          %s804 = sand.u32 %s133, 1
          %s805 = smul.addr %s804, 256
          %s806 = scalar_lea.vmem [#allocation9], %s805
          %807 = dma.done %s803, 4096
        $region64: #{tpu_custom_call.1} parent=59 // pred_fallthru
          _
      $region60: #{tpu_custom_call.1} parent=5 // pred_fallthru
        _
    $region6: #{tpu_custom_call.1} parent=1 // loop_footer
      %s20 = sadd.s32 1, %s16
    $region7: #{tpu_custom_call.1} parent=1 // loop_footer_branch
      %15 = sbr.rel target = $region3
    $region8: #{tpu_custom_call.1} parent=1 // loop_exit
      _
    %808 = vsyncpa [#allocation4], 1
    %s809 = scalar_lea.sflag [#allocation4], 1
    %810 = vsyncpa %s809, 1
    %811 = vsyncpa [#allocation7], 1
    %812 = vsyncpa [#allocation5], 1
    %s813 = scalar_lea.sflag [#allocation5], 1
    %814 = vsyncpa %s813, 1

</llo_original>
